<compile_context>
chip_gen: v7x
topology: tpu7x:2x2x1
jax: 0.10.0
libtpu: 0.0.40
codegen_flags: <defaults>
</compile_context>

<pallas_src>
import functools

import jax
import jax.numpy as jnp
from jax.experimental import pallas as pl
from jax.experimental.pallas import tpu as pltpu


def _mlp_kernel(x_ref, w1_ref, b1_ref, w2_ref, b2_ref, w3_ref, b3_ref, o_ref):
    # Hot path: three matmuls + bias + ReLU, fused in one kernel invocation.
    # Accumulation is always f32 (preferred_element_type); activations are cast
    # back to the operand dtype so the next matmul stays on the native MXU path.
    cdt = x_ref.dtype
    h1 = jnp.dot(x_ref[...], w1_ref[...], preferred_element_type=jnp.float32) + b1_ref[...]
    h1 = jnp.maximum(h1, 0.0).astype(cdt)
    h2 = jnp.dot(h1, w2_ref[...], preferred_element_type=jnp.float32) + b2_ref[...]
    h2 = jnp.maximum(h2, 0.0).astype(cdt)
    out = jnp.dot(h2, w3_ref[...], preferred_element_type=jnp.float32) + b3_ref[...]
    o_ref[...] = out.astype(o_ref.dtype)


def _round_up(x, m):
    return ((x + m - 1) // m) * m


def _default_batch_tile(B):
    # Small batches: one tile covering the whole (8-aligned) batch.
    if B <= 256:
        return _round_up(B, 8)
    # Large batches: big tiles, multiple of 256 (v6e MXU rows), capped at 512,
    # and split so the grid has >= 2 steps (feeds v7x's second TensorCore).
    return min(512, _round_up(pl.cdiv(B, 2), 256))


@functools.partial(jax.jit, static_argnames=("batch_tile", "compute_dtype"))
def model_h2_forward(x, w1, b1, w2, b2, w3, b3, *, batch_tile=None,
                     compute_dtype=jnp.float32):
    """x: (B, in_size); wN: (fan_in, fan_out); bN: (1, fan_out). Output is f32."""
    B, in_size = x.shape
    h1_size = w1.shape[1]
    h2_size = w2.shape[1]
    out_size = w3.shape[1]

    if batch_tile is None:
        batch_tile = _default_batch_tile(B)
    batch_tile = _round_up(batch_tile, 8)          # keep sublane-aligned tiles
    num_tiles = pl.cdiv(B, batch_tile)
    B_pad = num_tiles * batch_tile

    # Cast operands; biases stay f32 (added to the f32 accumulator).
    x = x.astype(compute_dtype)
    w1c, w2c, w3c = (w.astype(compute_dtype) for w in (w1, w2, w3))
    b1c, b2c, b3c = (b.astype(jnp.float32) for b in (b1, b2, b3))

    if B_pad != B:
        x = jnp.pad(x, ((0, B_pad - B), (0, 0)))

    # Only raise the scoped-VMEM limit when the tile actually needs it.
    itemsize = jnp.dtype(compute_dtype).itemsize
    io_bytes = 2 * batch_tile * (in_size * itemsize + out_size * 4)         # dbl-buffered x/out
    w_bytes = 2 * ((in_size * h1_size + h1_size * h2_size + h2_size * out_size) * itemsize
                   + (h1_size + h2_size + out_size) * 4)
    act_bytes = batch_tile * (h1_size + h2_size) * 4
    est = io_bytes + w_bytes + act_bytes
    vmem_limit = int(est * 1.5) if est > (12 << 20) else None

    # Weights / biases are tiny: replicate the full tensor for every grid step.
    full = lambda shape: pl.BlockSpec(shape, lambda i: tuple(0 for _ in shape))

    out = pl.pallas_call(
        _mlp_kernel,
        out_shape=jax.ShapeDtypeStruct((B_pad, out_size), jnp.float32),
        grid_spec=pltpu.PrefetchScalarGridSpec(
            num_scalar_prefetch=0,
            grid=(num_tiles,),
            in_specs=[
                pl.BlockSpec((batch_tile, in_size), lambda i: (i, 0)),
                full((in_size, h1_size)),
                full((1, h1_size)),
                full((h1_size, h2_size)),
                full((1, h2_size)),
                full((h2_size, out_size)),
                full((1, out_size)),
            ],
            out_specs=pl.BlockSpec((batch_tile, out_size), lambda i: (i, 0)),
        ),
        compiler_params=pltpu.CompilerParams(
            dimension_semantics=("parallel",),
            vmem_limit_bytes=vmem_limit,
        ),
    )(x, w1c, b1c, w2c, b2c, w3c, b3c)

    return out[:B]


def init_linear_params(key, fan_in, fan_out):
    """PyTorch nn.Linear default init: U(-1/sqrt(fan_in), 1/sqrt(fan_in)).

    Returns W already transposed to (fan_in, fan_out) and b as (1, fan_out)."""
    kw, kb = jax.random.split(key)
    bound = 1.0 / (fan_in ** 0.5)
    w = jax.random.uniform(kw, (fan_in, fan_out), jnp.float32, -bound, bound)
    b = jax.random.uniform(kb, (1, fan_out), jnp.float32, -bound, bound)
    return w, b


def reference_forward(x, w1, b1, w2, b2, w3, b3):
    h1 = jnp.maximum(x @ w1 + b1, 0.0)
    h2 = jnp.maximum(h1 @ w2 + b2, 0.0)
    return h2 @ w3 + b3


if __name__ == "__main__":
    # Small shapes consistent with the module: in=32, hidden1=64, hidden2=48, out=16.
    # batch=10 exercises the pad-to-tile / cdiv-grid path (not a multiple of 8).
    batch, in_size, h1_size, h2_size, out_size = 10, 32, 64, 48, 16

    root = jax.random.PRNGKey(0)
    kx, k1, k2, k3 = jax.random.split(root, 4)

    x = jax.random.normal(kx, (batch, in_size), jnp.float32)
    w1, b1 = init_linear_params(k1, in_size, h1_size)
    w2, b2 = init_linear_params(k2, h1_size, h2_size)
    w3, b3 = init_linear_params(k3, h2_size, out_size)

    ref = reference_forward(x, w1, b1, w2, b2, w3, b3)

    # f32 path (closest to the f64 PyTorch reference).
    out = model_h2_forward(x, w1, b1, w2, b2, w3, b3)
    out = jax.block_until_ready(out)
    assert out.shape == (batch, out_size)
    assert jnp.allclose(out, ref, atol=1e-5, rtol=1e-5), "f32 mismatch vs reference"

    # bf16-operand fast path (f32 accumulation), relaxed tolerance.
    out_bf16 = model_h2_forward(x, w1, b1, w2, b2, w3, b3, compute_dtype=jnp.bfloat16)
    out_bf16 = jax.block_until_ready(out_bf16)
    assert out_bf16.shape == (batch, out_size)
    assert jnp.allclose(out_bf16, ref, atol=5e-2, rtol=5e-2), "bf16 mismatch vs reference"

    print("KERNEL_OK")
</pallas_src>

<mosaic_0001>
module attributes {stable_mosaic.version = 11 : i64} {
  func.func @_mlp_kernel(%arg0: i32, %arg1: memref<16x32xf32, #tpu.memory_space<vmem>>, %arg2: memref<32x64xf32, #tpu.memory_space<vmem>>, %arg3: memref<1x64xf32, #tpu.memory_space<vmem>>, %arg4: memref<64x48xf32, #tpu.memory_space<vmem>>, %arg5: memref<1x48xf32, #tpu.memory_space<vmem>>, %arg6: memref<48x16xf32, #tpu.memory_space<vmem>>, %arg7: memref<1x16xf32, #tpu.memory_space<vmem>>, %arg8: memref<16x16xf32, #tpu.memory_space<vmem>>) attributes {dimension_semantics = [#tpu.dimension_semantics<parallel>], iteration_bounds = array<i64: 1>, scalar_prefetch = 0 : i64, scratch_operands = 0 : i64, tpu.core_type = #tpu.core_type<tc>, window_params = [{transform_indices = @transform_0, window_bounds = array<i64: 16, 32>}, {pipeline_mode = #tpu.pipeline_mode<synchronous>, transform_indices = @transform_1, window_bounds = array<i64: 32, 64>}, {pipeline_mode = #tpu.pipeline_mode<synchronous>, transform_indices = @transform_2, window_bounds = array<i64: 1, 64>}, {pipeline_mode = #tpu.pipeline_mode<synchronous>, transform_indices = @transform_3, window_bounds = array<i64: 64, 48>}, {pipeline_mode = #tpu.pipeline_mode<synchronous>, transform_indices = @transform_4, window_bounds = array<i64: 1, 48>}, {pipeline_mode = #tpu.pipeline_mode<synchronous>, transform_indices = @transform_5, window_bounds = array<i64: 48, 16>}, {pipeline_mode = #tpu.pipeline_mode<synchronous>, transform_indices = @transform_6, window_bounds = array<i64: 1, 16>}, {transform_indices = @transform_7, window_bounds = array<i64: 16, 16>}]} {
    %c0 = arith.constant 0 : index
    %c0_0 = arith.constant 0 : index
    %0 = vector.load %arg1[%c0, %c0_0] : memref<16x32xf32, #tpu.memory_space<vmem>>, vector<16x32xf32>
    %c0_1 = arith.constant 0 : index
    %c0_2 = arith.constant 0 : index
    %1 = vector.load %arg2[%c0_1, %c0_2] : memref<32x64xf32, #tpu.memory_space<vmem>>, vector<32x64xf32>
    %cst = arith.constant dense<0.000000e+00> : vector<16x64xf32>
    %2 = tpu.matmul %0, %1, %cst {dimension_numbers = #tpu.dot_dimension_numbers<[1], [0], [0], [1], [0, 0, 1, 1], [], []>} : vector<16x32xf32>, vector<32x64xf32>, vector<16x64xf32> -> vector<16x64xf32>
    %c0_3 = arith.constant 0 : index
    %c0_4 = arith.constant 0 : index
    %3 = vector.load %arg3[%c0_3, %c0_4] : memref<1x64xf32, #tpu.memory_space<vmem>>, vector<1x64xf32>
    %4 = vector.broadcast %3 : vector<1x64xf32> to vector<16x64xf32>
    %5 = arith.addf %2, %4 : vector<16x64xf32>
    %cst_5 = arith.constant 0.000000e+00 : f32
    %6 = vector.broadcast %cst_5 : f32 to vector<16x64xf32>
    %7 = arith.maximumf %5, %6 : vector<16x64xf32>
    %c0_6 = arith.constant 0 : index
    %c0_7 = arith.constant 0 : index
    %8 = vector.load %arg4[%c0_6, %c0_7] : memref<64x48xf32, #tpu.memory_space<vmem>>, vector<64x48xf32>
    %cst_8 = arith.constant dense<0.000000e+00> : vector<16x48xf32>
    %9 = tpu.matmul %7, %8, %cst_8 {dimension_numbers = #tpu.dot_dimension_numbers<[1], [0], [0], [1], [0, 0, 1, 1], [], []>} : vector<16x64xf32>, vector<64x48xf32>, vector<16x48xf32> -> vector<16x48xf32>
    %c0_9 = arith.constant 0 : index
    %c0_10 = arith.constant 0 : index
    %10 = vector.load %arg5[%c0_9, %c0_10] : memref<1x48xf32, #tpu.memory_space<vmem>>, vector<1x48xf32>
    %11 = vector.broadcast %10 : vector<1x48xf32> to vector<16x48xf32>
    %12 = arith.addf %9, %11 : vector<16x48xf32>
    %cst_11 = arith.constant 0.000000e+00 : f32
    %13 = vector.broadcast %cst_11 : f32 to vector<16x48xf32>
    %14 = arith.maximumf %12, %13 : vector<16x48xf32>
    %c0_12 = arith.constant 0 : index
    %c0_13 = arith.constant 0 : index
    %15 = vector.load %arg6[%c0_12, %c0_13] : memref<48x16xf32, #tpu.memory_space<vmem>>, vector<48x16xf32>
    %cst_14 = arith.constant dense<0.000000e+00> : vector<16x16xf32>
    %16 = tpu.matmul %14, %15, %cst_14 {dimension_numbers = #tpu.dot_dimension_numbers<[1], [0], [0], [1], [0, 0, 1, 1], [], []>} : vector<16x48xf32>, vector<48x16xf32>, vector<16x16xf32> -> vector<16x16xf32>
    %c0_15 = arith.constant 0 : index
    %c0_16 = arith.constant 0 : index
    %17 = vector.load %arg7[%c0_15, %c0_16] : memref<1x16xf32, #tpu.memory_space<vmem>>, vector<1x16xf32>
    %18 = vector.broadcast %17 : vector<1x16xf32> to vector<16x16xf32>
    %19 = arith.addf %16, %18 : vector<16x16xf32>
    %c0_17 = arith.constant 0 : index
    %c0_18 = arith.constant 0 : index
    %20 = vector.load %arg8[%c0_17, %c0_18] : memref<16x16xf32, #tpu.memory_space<vmem>>, vector<16x16xf32>
    tpu.vector_store %arg8[%c0_17, %c0_18], %19 {strides = array<i32>} : memref<16x16xf32, #tpu.memory_space<vmem>>, vector<16x16xf32>,
    return
  }
  func.func @transform_0(%arg0: i32) -> (i32, i32) {
    %c0_i32 = arith.constant 0 : i32
    %c0_i32_0 = arith.constant 0 : i32
    return %arg0, %c0_i32 : i32, i32
  }
  func.func @transform_1(%arg0: i32) -> (i32, i32) {
    %c0_i32 = arith.constant 0 : i32
    %c0_i32_0 = arith.constant 0 : i32
    %c0_i32_1 = arith.constant 0 : i32
    return %c0_i32, %c0_i32_0 : i32, i32
  }
  func.func @transform_2(%arg0: i32) -> (i32, i32) {
    %c0_i32 = arith.constant 0 : i32
    %c0_i32_0 = arith.constant 0 : i32
    %c0_i32_1 = arith.constant 0 : i32
    return %c0_i32, %c0_i32_0 : i32, i32
  }
  func.func @transform_3(%arg0: i32) -> (i32, i32) {
    %c0_i32 = arith.constant 0 : i32
    %c0_i32_0 = arith.constant 0 : i32
    %c0_i32_1 = arith.constant 0 : i32
    return %c0_i32, %c0_i32_0 : i32, i32
  }
  func.func @transform_4(%arg0: i32) -> (i32, i32) {
    %c0_i32 = arith.constant 0 : i32
    %c0_i32_0 = arith.constant 0 : i32
    %c0_i32_1 = arith.constant 0 : i32
    return %c0_i32, %c0_i32_0 : i32, i32
  }
  func.func @transform_5(%arg0: i32) -> (i32, i32) {
    %c0_i32 = arith.constant 0 : i32
    %c0_i32_0 = arith.constant 0 : i32
    %c0_i32_1 = arith.constant 0 : i32
    return %c0_i32, %c0_i32_0 : i32, i32
  }
  func.func @transform_6(%arg0: i32) -> (i32, i32) {
    %c0_i32 = arith.constant 0 : i32
    %c0_i32_0 = arith.constant 0 : i32
    %c0_i32_1 = arith.constant 0 : i32
    return %c0_i32, %c0_i32_0 : i32, i32
  }
  func.func @transform_7(%arg0: i32) -> (i32, i32) {
    %c0_i32 = arith.constant 0 : i32
    %c0_i32_0 = arith.constant 0 : i32
    return %arg0, %c0_i32 : i32, i32
  }
}

</mosaic_0001>

<llo_original>
// kernel: model_h2_forward.1
$region0: #{model_h2_forward.1}
  #allocation0 [shape = 'u32[]', space=smem, size = 0x4, offset = 0x4, fixed_abs, tag = 'smem constant byte address 0x4 - core index']
  #allocation1 [shape = 'u32[144,128]{1,0:T(1,128)}', space=vmem, size = 0x12000, scoped, tag = 'internal scratch']
  %s0 = inlined_call_operand.vmem [shape: f32[16,32], index: 0, kind: input, shape index: {}]
  %s1 = inlined_call_operand.vmem [shape: f32[32,64], index: 1, kind: input, shape index: {}]
  %s2 = inlined_call_operand.vmem [shape: f32[1,64], index: 2, kind: input, shape index: {}]
  %s3 = inlined_call_operand.vmem [shape: f32[64,48], index: 3, kind: input, shape index: {}]
  %s4 = inlined_call_operand.vmem [shape: f32[1,48], index: 4, kind: input, shape index: {}]
  %s5 = inlined_call_operand.vmem [shape: f32[48,16], index: 5, kind: input, shape index: {}]
  %s6 = inlined_call_operand.vmem [shape: f32[1,16], index: 6, kind: input, shape index: {}]
  %s7 = inlined_call_operand.hbm [shape: f32[16,16], index: 7, kind: output, shape index: {}]
  %s8 = sld [smem:[#allocation0]]
  $region38: #{model_h2_forward.1} parent=0
    _
  %s10 = ssub.s32 1, %s8
  %s11 = scalar_select 0, %s10, %s8
  $region1: #{model_h2_forward.1} parent=0
    #allocation2 [shape = 'u8[8192]{0}', space=vmem, size = 0x2000, scoped, tag = 'output window, operand 0, single buffered']
    #allocation3 [shape = 's32[1]{0}', space=sflag, size = 0x4, scoped, tag = 'scoped memory for model_h2_forward.1']
    %12 = vsyncpa [#allocation3], 0
    // Predicated region
    $region2: #{model_h2_forward.1} parent=1 // pred_check
      _
    $region3: #{model_h2_forward.1} parent=1 // pred_check_branch
      %14 = sbr.rel (0) target = $region5
    $region4: #{model_h2_forward.1} parent=1 // pred_region
      _
    $region5: #{model_h2_forward.1} parent=1 // pred_fallthru
      _
    // Predicated region
    $region6: #{model_h2_forward.1} parent=1 // pred_check
      _
    $region7: #{model_h2_forward.1} parent=1 // pred_check_branch
      %16 = sbr.rel (0) target = $region9
    $region8: #{model_h2_forward.1} parent=1 // pred_region
      _
    $region9: #{model_h2_forward.1} parent=1 // pred_fallthru
      _
    // Predicated region
    $region10: #{model_h2_forward.1} parent=1 // pred_check
      _
    $region11: #{model_h2_forward.1} parent=1 // pred_check_branch
      %18 = sbr.rel (0) target = $region13
    $region12: #{model_h2_forward.1} parent=1 // pred_region
      _
    $region13: #{model_h2_forward.1} parent=1 // pred_fallthru
      _
    // Predicated region
    $region14: #{model_h2_forward.1} parent=1 // pred_check
      _
    $region15: #{model_h2_forward.1} parent=1 // pred_check_branch
      %20 = sbr.rel (0) target = $region17
    $region16: #{model_h2_forward.1} parent=1 // pred_region
      _
    $region17: #{model_h2_forward.1} parent=1 // pred_fallthru
      _
    // Predicated region
    $region18: #{model_h2_forward.1} parent=1 // pred_check
      _
    $region19: #{model_h2_forward.1} parent=1 // pred_check_branch
      %22 = sbr.rel (0) target = $region21
    $region20: #{model_h2_forward.1} parent=1 // pred_region
      _
    $region21: #{model_h2_forward.1} parent=1 // pred_fallthru
      _
    // Predicated region
    $region22: #{model_h2_forward.1} parent=1 // pred_check
      _
    $region23: #{model_h2_forward.1} parent=1 // pred_check_branch
      %24 = sbr.rel (0) target = $region25
    $region24: #{model_h2_forward.1} parent=1 // pred_region
      _
    $region25: #{model_h2_forward.1} parent=1 // pred_fallthru
      _
    // Predicated region
    $region26: #{model_h2_forward.1} parent=1 // pred_check
      _
    $region27: #{model_h2_forward.1} parent=1 // pred_check_branch
      %26 = sbr.rel (0) target = $region29
    $region28: #{model_h2_forward.1} parent=1 // pred_region
      _
    $region29: #{model_h2_forward.1} parent=1 // pred_fallthru
      _
    %v27 = vld [vmem:[%s0] sm:$0xff]
    %v28 = vld [vmem:[%s0 + $0x8] sm:$0xff]
    %v29 = vld [vmem:[%s1] sm:$0xff]
    %v30 = vld [vmem:[%s1 + $0x8] sm:$0xff]
    %v31 = vld [vmem:[%s1 + $0x10] sm:$0xff]
    %v32 = vld [vmem:[%s1 + $0x18] sm:$0xff]
    %v33 = vld [vmem:[%s2] sm:$0x1]
    %v35 = vlaneseq
    %v36 = vshrl.u32 %v35, 7
    %v37 = vsub.s32 0, %v36
    %v38 = vrot.slane %v33, %v37
    %vm40 = vcmask 261120
    %v42 = vsel %vm40, %v27, 0
    %v45 = vsel %vm40, %v28, 0
    %47 = vmatprep.subr.mxu0 0.0
    %48 = vmatpush1.msra.mxu0 %v29
    %49 = vmatprep.subr.mxu0 0.0
    %50 = vmatpush1.msra.mxu0 %v30
    %51 = vmatprep.subr.mxu0 0.0
    %52 = vmatpush1.msra.mxu0 %v31
    %53 = vmatprep.subr.mxu0 0.0
    %54 = vmatpush1.msra.mxu0 %v32
    %55 = vmatprep.subr.mxu0 0.0
    %56 = vmatpush1.msra.mxu0 0.0
    %57 = vmatprep.subr.mxu0 0.0
    %58 = vmatpush1.msra.mxu0 0.0
    %59 = vmatprep.subr.mxu0 0.0
    %60 = vmatpush1.msra.mxu0 0.0
    %61 = vmatprep.subr.mxu0 0.0
    %62 = vmatpush1.msra.mxu0 0.0
    %63 = vmatprep.subr.mxu0 0.0
    %64 = vmatpush1.msra.mxu0 0.0
    %65 = vmatprep.subr.mxu0 0.0
    %66 = vmatpush1.msra.mxu0 0.0
    %67 = vmatprep.subr.mxu0 0.0
    %68 = vmatpush1.msra.mxu0 0.0
    %69 = vmatprep.subr.mxu0 0.0
    %70 = vmatpush1.msra.mxu0 0.0
    %71 = vmatprep.subr.mxu0 0.0
    %72 = vmatpush1.msra.mxu0 0.0
    %73 = vmatprep.subr.mxu0 0.0
    %74 = vmatpush1.msra.mxu0 0.0
    %75 = vmatprep.subr.mxu0 0.0
    %76 = vmatpush1.msra.mxu0 0.0
    %77 = vmatprep.subr.mxu0 0.0
    %78 = vmatpush1.msra.mxu0 0.0
    %79 = vmatprep.subr.mxu0 0.0
    %80 = vmatpush1.msra.mxu0 0.0
    %81 = vmatprep.subr.mxu0 0.0
    %82 = vmatpush1.msra.mxu0 0.0
    %83 = vmatprep.subr.mxu0 0.0
    %84 = vmatpush1.msra.mxu0 0.0
    %85 = vmatprep.subr.mxu0 0.0
    %86 = vmatpush1.msra.mxu0 0.0
    %87 = vmatprep.subr.mxu0 0.0
    %88 = vmatpush1.msra.mxu0 0.0
    %89 = vmatprep.subr.mxu0 0.0
    %90 = vmatpush1.msra.mxu0 0.0
    %91 = vmatprep.subr.mxu0 0.0
    %92 = vmatpush1.msra.mxu0 0.0
    %93 = vmatprep.subr.mxu0 0.0
    %94 = vmatpush1.msra.mxu0 0.0
    %95 = vmatprep.subr.mxu0 0.0
    %96 = vmatpush1.msra.mxu0 0.0
    %97 = vmatprep.subr.mxu0 0.0
    %98 = vmatpush1.msra.mxu0 0.0
    %99 = vmatprep.subr.mxu0 0.0
    %100 = vmatpush1.msra.mxu0 0.0
    %101 = vmatprep.subr.mxu0 0.0
    %102 = vmatpush1.msra.mxu0 0.0
    %103 = vmatprep.subr.mxu0 0.0
    %104 = vmatpush1.msra.mxu0 0.0
    %105 = vmatprep.subr.mxu0 0.0
    %106 = vmatpush1.msra.mxu0 0.0
    %107 = vmatprep.subr.mxu0 0.0
    %108 = vmatpush1.msra.mxu0 0.0
    %109 = vmatprep.subr.mxu0 0.0
    %110 = vmatpush1.msra.mxu0 0.0
    %111 = vmatprep.mubr.f32.mxu0 0.0
    %112 = vmatmul.mubr.f32.gmra.mrb[0].mxu0 %v42
    %v113 = vpop.f32.mrb[0].mxu0
    %v114 = vadd.f32 %v38, %v113
    %v115 = vpop.f32.mrb[0].mxu0
    %116 = vmatprep.mubr.f32.mxu0 0.0
    %117 = vmatmul.mubr.f32.gmra.mrb[0].mxu0 %v45
    %v118 = vpop.f32.mrb[0].mxu0
    %v119 = vadd.f32 %v38, %v118
    %v120 = vpop.f32.mrb[0].mxu0
    %121 = vdwg.mxu0
    %v122 = vmax.f32 %v114, 0.0
    %v123 = vmax.f32 %v119, 0.0
    %v124 = vld [vmem:[%s3] sm:$0xff]
    %v125 = vld [vmem:[%s3 + $0x8] sm:$0xff]
    %v126 = vld [vmem:[%s3 + $0x10] sm:$0xff]
    %v127 = vld [vmem:[%s3 + $0x18] sm:$0xff]
    %v128 = vld [vmem:[%s3 + $0x20] sm:$0xff]
    %v129 = vld [vmem:[%s3 + $0x28] sm:$0xff]
    %v130 = vld [vmem:[%s3 + $0x30] sm:$0xff]
    %v131 = vld [vmem:[%s3 + $0x38] sm:$0xff]
    %v132 = vld [vmem:[%s4] sm:$0x1]
    %v134 = vlaneseq
    %v135 = vshrl.u32 %v134, 7
    %v136 = vsub.s32 0, %v135
    %v137 = vrot.slane %v132, %v136
    %vm139 = vcmask 523264
    %v141 = vsel %vm139, %v122, 0
    %v144 = vsel %vm139, %v123, 0
    %146 = vmatprep.subr.mxu0 0.0
    %147 = vmatpush1.msra.mxu0 %v124
    %148 = vmatprep.subr.mxu0 0.0
    %149 = vmatpush1.msra.mxu0 %v125
    %150 = vmatprep.subr.mxu0 0.0
    %151 = vmatpush1.msra.mxu0 %v126
    %152 = vmatprep.subr.mxu0 0.0
    %153 = vmatpush1.msra.mxu0 %v127
    %154 = vmatprep.subr.mxu0 0.0
    %155 = vmatpush1.msra.mxu0 %v128
    %156 = vmatprep.subr.mxu0 0.0
    %157 = vmatpush1.msra.mxu0 %v129
    %158 = vmatprep.subr.mxu0 0.0
    %159 = vmatpush1.msra.mxu0 %v130
    %160 = vmatprep.subr.mxu0 0.0
    %161 = vmatpush1.msra.mxu0 %v131
    %162 = vmatprep.subr.mxu0 0.0
    %163 = vmatpush1.msra.mxu0 0.0
    %164 = vmatprep.subr.mxu0 0.0
    %165 = vmatpush1.msra.mxu0 0.0
    %166 = vmatprep.subr.mxu0 0.0
    %167 = vmatpush1.msra.mxu0 0.0
    %168 = vmatprep.subr.mxu0 0.0
    %169 = vmatpush1.msra.mxu0 0.0
    %170 = vmatprep.subr.mxu0 0.0
    %171 = vmatpush1.msra.mxu0 0.0
    %172 = vmatprep.subr.mxu0 0.0
    %173 = vmatpush1.msra.mxu0 0.0
    %174 = vmatprep.subr.mxu0 0.0
    %175 = vmatpush1.msra.mxu0 0.0
    %176 = vmatprep.subr.mxu0 0.0
    %177 = vmatpush1.msra.mxu0 0.0
    %178 = vmatprep.subr.mxu0 0.0
    %179 = vmatpush1.msra.mxu0 0.0
    %180 = vmatprep.subr.mxu0 0.0
    %181 = vmatpush1.msra.mxu0 0.0
    %182 = vmatprep.subr.mxu0 0.0
    %183 = vmatpush1.msra.mxu0 0.0
    %184 = vmatprep.subr.mxu0 0.0
    %185 = vmatpush1.msra.mxu0 0.0
    %186 = vmatprep.subr.mxu0 0.0
    %187 = vmatpush1.msra.mxu0 0.0
    %188 = vmatprep.subr.mxu0 0.0
    %189 = vmatpush1.msra.mxu0 0.0
    %190 = vmatprep.subr.mxu0 0.0
    %191 = vmatpush1.msra.mxu0 0.0
    %192 = vmatprep.subr.mxu0 0.0
    %193 = vmatpush1.msra.mxu0 0.0
    %194 = vmatprep.subr.mxu0 0.0
    %195 = vmatpush1.msra.mxu0 0.0
    %196 = vmatprep.subr.mxu0 0.0
    %197 = vmatpush1.msra.mxu0 0.0
    %198 = vmatprep.subr.mxu0 0.0
    %199 = vmatpush1.msra.mxu0 0.0
    %200 = vmatprep.subr.mxu0 0.0
    %201 = vmatpush1.msra.mxu0 0.0
    %202 = vmatprep.subr.mxu0 0.0
    %203 = vmatpush1.msra.mxu0 0.0
    %204 = vmatprep.subr.mxu0 0.0
    %205 = vmatpush1.msra.mxu0 0.0
    %206 = vmatprep.subr.mxu0 0.0
    %207 = vmatpush1.msra.mxu0 0.0
    %208 = vmatprep.subr.mxu0 0.0
    %209 = vmatpush1.msra.mxu0 0.0
    %210 = vmatprep.mubr.f32.mxu0 0.0
    %211 = vmatmul.mubr.f32.gmra.mrb[0].mxu0 %v141
    %v212 = vpop.f32.mrb[0].mxu0
    %v213 = vadd.f32 %v137, %v212
    %v214 = vpop.f32.mrb[0].mxu0
    %215 = vmatprep.mubr.f32.mxu0 0.0
    %216 = vmatmul.mubr.f32.gmra.mrb[0].mxu0 %v144
    %v217 = vpop.f32.mrb[0].mxu0
    %v218 = vadd.f32 %v137, %v217
    %v219 = vpop.f32.mrb[0].mxu0
    %220 = vdwg.mxu0
    %v221 = vmax.f32 %v213, 0.0
    %v222 = vmax.f32 %v218, 0.0
    %v223 = vld [vmem:[%s5] sm:$0xff]
    %v224 = vld [vmem:[%s5 + $0x8] sm:$0xff]
    %v225 = vld [vmem:[%s5 + $0x10] sm:$0xff]
    %v226 = vld [vmem:[%s5 + $0x18] sm:$0xff]
    %v227 = vld [vmem:[%s5 + $0x20] sm:$0xff]
    %v228 = vld [vmem:[%s5 + $0x28] sm:$0xff]
    %v229 = vld [vmem:[%s6] sm:$0x1]
    %v231 = vlaneseq
    %v232 = vshrl.u32 %v231, 7
    %v233 = vsub.s32 0, %v232
    %v234 = vrot.slane %v229, %v233
    %vm236 = vcmask 392192
    %v238 = vsel %vm236, %v221, 0
    %v241 = vsel %vm236, %v222, 0
    %243 = vmatprep.subr.mxu0 0.0
    %244 = vmatpush1.msra.mxu0 %v223
    %245 = vmatprep.subr.mxu0 0.0
    %246 = vmatpush1.msra.mxu0 %v224
    %247 = vmatprep.subr.mxu0 0.0
    %248 = vmatpush1.msra.mxu0 %v225
    %249 = vmatprep.subr.mxu0 0.0
    %250 = vmatpush1.msra.mxu0 %v226
    %251 = vmatprep.subr.mxu0 0.0
    %252 = vmatpush1.msra.mxu0 %v227
    %253 = vmatprep.subr.mxu0 0.0
    %254 = vmatpush1.msra.mxu0 %v228
    %255 = vmatprep.subr.mxu0 0.0
    %256 = vmatpush1.msra.mxu0 0.0
    %257 = vmatprep.subr.mxu0 0.0
    %258 = vmatpush1.msra.mxu0 0.0
    %259 = vmatprep.subr.mxu0 0.0
    %260 = vmatpush1.msra.mxu0 0.0
    %261 = vmatprep.subr.mxu0 0.0
    %262 = vmatpush1.msra.mxu0 0.0
    %263 = vmatprep.subr.mxu0 0.0
    %264 = vmatpush1.msra.mxu0 0.0
    %265 = vmatprep.subr.mxu0 0.0
    %266 = vmatpush1.msra.mxu0 0.0
    %267 = vmatprep.subr.mxu0 0.0
    %268 = vmatpush1.msra.mxu0 0.0
    %269 = vmatprep.subr.mxu0 0.0
    %270 = vmatpush1.msra.mxu0 0.0
    %271 = vmatprep.subr.mxu0 0.0
    %272 = vmatpush1.msra.mxu0 0.0
    %273 = vmatprep.subr.mxu0 0.0
    %274 = vmatpush1.msra.mxu0 0.0
    %275 = vmatprep.subr.mxu0 0.0
    %276 = vmatpush1.msra.mxu0 0.0
    %277 = vmatprep.subr.mxu0 0.0
    %278 = vmatpush1.msra.mxu0 0.0
    %279 = vmatprep.subr.mxu0 0.0
    %280 = vmatpush1.msra.mxu0 0.0
    %281 = vmatprep.subr.mxu0 0.0
    %282 = vmatpush1.msra.mxu0 0.0
    %283 = vmatprep.subr.mxu0 0.0
    %284 = vmatpush1.msra.mxu0 0.0
    %285 = vmatprep.subr.mxu0 0.0
    %286 = vmatpush1.msra.mxu0 0.0
    %287 = vmatprep.subr.mxu0 0.0
    %288 = vmatpush1.msra.mxu0 0.0
    %289 = vmatprep.subr.mxu0 0.0
    %290 = vmatpush1.msra.mxu0 0.0
    %291 = vmatprep.subr.mxu0 0.0
    %292 = vmatpush1.msra.mxu0 0.0
    %293 = vmatprep.subr.mxu0 0.0
    %294 = vmatpush1.msra.mxu0 0.0
    %295 = vmatprep.subr.mxu0 0.0
    %296 = vmatpush1.msra.mxu0 0.0
    %297 = vmatprep.subr.mxu0 0.0
    %298 = vmatpush1.msra.mxu0 0.0
    %299 = vmatprep.subr.mxu0 0.0
    %300 = vmatpush1.msra.mxu0 0.0
    %301 = vmatprep.subr.mxu0 0.0
    %302 = vmatpush1.msra.mxu0 0.0
    %303 = vmatprep.subr.mxu0 0.0
    %304 = vmatpush1.msra.mxu0 0.0
    %305 = vmatprep.subr.mxu0 0.0
    %306 = vmatpush1.msra.mxu0 0.0
    %307 = vmatprep.mubr.f32.mxu0 0.0
    %308 = vmatmul.mubr.f32.gmra.mrb[0].mxu0 %v238
    %v309 = vpop.f32.mrb[0].mxu0
    %v310 = vadd.f32 %v234, %v309
    %v311 = vpop.f32.mrb[0].mxu0
    %312 = vmatprep.mubr.f32.mxu0 0.0
    %313 = vmatmul.mubr.f32.gmra.mrb[0].mxu0 %v241
    %v314 = vpop.f32.mrb[0].mxu0
    %v315 = vadd.f32 %v234, %v314
    %v316 = vpop.f32.mrb[0].mxu0
    %317 = vdwg.mxu0
    %vm318 = vcmask 130048
    %319 = vst.msk [vmem:[#allocation2] sm:$0xff] %vm318, %v310
    %320 = vst.msk [vmem:[#allocation2 + $0x8] sm:$0xff] %vm318, %v315
    // Predicated region
    $region30: #{model_h2_forward.1} parent=1 // pred_check
      _
    $region31: #{model_h2_forward.1} parent=1 // pred_check_branch
      %322 = sbr.rel (0) target = $region33
    $region32: #{model_h2_forward.1} parent=1 // pred_region
      %s324 = ssub.s32 256, 256
      %325 = vsyncadd [#allocation3], %s324
      %s326 = sshll.u32 [#allocation2], 4
      %s327 = int_to_ptr.vmem [resolvable:$true] %s326
      %332 = dma.vmem_to_hbm [thread:$0]  %s327, 256, %s7, [#allocation3], 128, 128, 8
    $region33: #{model_h2_forward.1} parent=1 // pred_fallthru
      _
    // Predicated region
    $region34: #{model_h2_forward.1} parent=1 // pred_check
      _
    $region35: #{model_h2_forward.1} parent=1 // pred_check_branch
      %334 = sbr.rel (0) target = $region37
    $region36: #{model_h2_forward.1} parent=1 // pred_region
      %335 = dma.done [#allocation3], 256
    $region37: #{model_h2_forward.1} parent=1 // pred_fallthru
      _
    %336 = vsyncpa [#allocation3], 1

</llo_original>
